<compile_context>
chip_gen: v7x
topology: tpu7x:2x2x1
jax: 0.10.0
libtpu: 0.0.40
codegen_flags: <defaults>
</compile_context>

<pallas_src>
import jax
import jax.numpy as jnp
from jax.experimental import pallas as pl
from jax.experimental.pallas import tpu as pltpu


def linear_kernel(b_ref, w_ref, x_ref, o_ref):
    # b_ref: (1,)    f32 in SMEM  (bias scalar)
    # w_ref: (K, 1)  f32 in VMEM  (weight column, broadcast along lanes)
    # x_ref: (K, TN) f32 in VMEM  (batch on the lane axis)
    # o_ref: (1, TN) f32 in VMEM  (lane-dense output)
    xv = x_ref[...]                                        # one full-block load
    o_ref[...] = jnp.sum(xv * w_ref[...], axis=0, keepdims=True) + b_ref[0]


def _round_up(a, b):
    return ((a + b - 1) // b) * b


def _choose_tile(n, cap):
    # Single grid step whenever round_up(N,128) fits under the cap; otherwise
    # big lane-dense tiles so the fixed per-step overhead is amortized.
    return min(_round_up(max(n, 1), 128), cap)


def prepare_feature_major(x, tn):
    """One-time layout plumbing: (N, K) -> (K, n_pad) f32, zero-padded lanes.

    Hoist/cache this outside a training loop that reuses the same x.
    """
    n, _ = x.shape
    n_pad = _round_up(n, tn)
    return jnp.pad(x.T.astype(jnp.float32), ((0, 0), (0, n_pad - n)))


def linear_pallas(xt, weight, bias, n, tn):
    """xt: (K, n_pad) feature-major f32 slab (from prepare_feature_major)."""
    k, n_pad = xt.shape
    w_col = weight.astype(jnp.float32).reshape(k, 1)       # (K, 1)
    b_flat = bias.astype(jnp.float32).reshape(-1)          # (1,)

    out = pl.pallas_call(
        linear_kernel,
        out_shape=jax.ShapeDtypeStruct((1, n_pad), jnp.float32),
        grid=(n_pad // tn,),
        in_specs=[
            pl.BlockSpec(memory_space=pltpu.MemorySpace.SMEM),   # bias scalar
            pl.BlockSpec(memory_space=pltpu.MemorySpace.VMEM),   # weight column
            pl.BlockSpec((k, tn), lambda i: (0, i)),             # x tile (K, TN)
        ],
        out_specs=pl.BlockSpec((1, tn), lambda i: (0, i)),       # lane-dense out
        compiler_params=pltpu.CompilerParams(
            dimension_semantics=("parallel",)),                  # megacore on v7x
    )(b_flat, w_col, xt)

    return out[0, :n].reshape(n, 1)


def over_fit_model_forward(x, weight, bias, *, block_cap=32768, use_pallas=None):
    """x: (N, 5) f32, weight: (1, 5) f32, bias: (1,) f32 -> (N, 1) f32."""
    n, k = x.shape
    if use_pallas is None:
        # At small N the custom-call launch + layout plumbing dominates and a
        # fused XLA dot is strictly faster; reserve Pallas for large N.
        use_pallas = n >= 4096
    if not use_pallas:
        return (x.astype(jnp.float32) @ weight.astype(jnp.float32).reshape(k, 1)
                + bias.astype(jnp.float32).reshape(1, 1))

    tn = _choose_tile(n, block_cap)
    xt = prepare_feature_major(x, tn)
    return linear_pallas(xt, weight, bias, n, tn)


if __name__ == "__main__":
    key = jax.random.PRNGKey(0)
    k_x, k_w, k_b, k_x2 = jax.random.split(key, 4)

    in_features = 5
    out_features = 1

    # Deterministic PyTorch-style init: uniform(-1/sqrt(fan_in), 1/sqrt(fan_in))
    bound = 1.0 / jnp.sqrt(jnp.float32(in_features))
    weight = jax.random.uniform(
        k_w, (out_features, in_features), jnp.float32, -bound, bound
    )
    bias = jax.random.uniform(k_b, (out_features,), jnp.float32, -bound, bound)

    # Case 1: N=256 -> single grid step (tn=256), force the Pallas path.
    batch = 256
    x = jax.random.normal(k_x, (batch, in_features), jnp.float32)
    y = jax.block_until_ready(over_fit_model_forward(x, weight, bias,
                                                     use_pallas=True))
    y_ref = x @ weight.T + bias
    assert y.shape == (batch, out_features)
    assert jnp.allclose(y, y_ref, atol=1e-5, rtol=1e-5)

    # Case 2: non-multiple-of-128 batch -> padded lanes sliced off correctly.
    batch2 = 1000
    x2 = jax.random.normal(k_x2, (batch2, in_features), jnp.float32)
    y2 = jax.block_until_ready(over_fit_model_forward(x2, weight, bias,
                                                      use_pallas=True))
    y2_ref = x2 @ weight.T + bias
    assert y2.shape == (batch2, out_features)
    assert jnp.allclose(y2, y2_ref, atol=1e-5, rtol=1e-5)

    print("KERNEL_OK")
</pallas_src>

<mosaic_0001>
module attributes {stable_mosaic.version = 11 : i64} {
  func.func @linear_kernel(%arg0: i32, %arg1: memref<1xf32, #tpu.memory_space<smem>>, %arg2: memref<5x1xf32, #tpu.memory_space<vmem>>, %arg3: memref<5x256xf32, #tpu.memory_space<vmem>>, %arg4: memref<1x256xf32, #tpu.memory_space<vmem>>) attributes {dimension_semantics = [#tpu.dimension_semantics<parallel>], iteration_bounds = array<i64: 1>, scalar_prefetch = 0 : i64, scratch_operands = 0 : i64, tpu.core_type = #tpu.core_type<tc>, window_params = [{transform_indices = @transform_0, window_bounds = array<i64: 1>}, {pipeline_mode = #tpu.pipeline_mode<synchronous>, transform_indices = @transform_1, window_bounds = array<i64: 5, 1>}, {transform_indices = @transform_2, window_bounds = array<i64: 5, 256>}, {transform_indices = @transform_3, window_bounds = array<i64: 1, 256>}]} {
    %c0 = arith.constant 0 : index
    %c0_0 = arith.constant 0 : index
    %0 = vector.load %arg3[%c0, %c0_0] : memref<5x256xf32, #tpu.memory_space<vmem>>, vector<5x256xf32>
    %c0_1 = arith.constant 0 : index
    %c0_2 = arith.constant 0 : index
    %1 = vector.load %arg2[%c0_1, %c0_2] : memref<5x1xf32, #tpu.memory_space<vmem>>, vector<5x1xf32>
    %2 = vector.broadcast %1 : vector<5x1xf32> to vector<5x256xf32>
    %3 = arith.mulf %0, %2 : vector<5x256xf32>
    %cst = arith.constant dense<0.000000e+00> : vector<256xf32>
    %4 = vector.multi_reduction <add>, %3, %cst [0] : vector<5x256xf32> to vector<256xf32>
    %5 = vector.shape_cast %4 : vector<256xf32> to vector<1x256xf32>
    %c0_3 = arith.constant 0 : index
    %6 = memref.load %arg1[%c0_3] : memref<1xf32, #tpu.memory_space<smem>>
    %7 = vector.broadcast %6 : f32 to vector<1x256xf32>
    %8 = arith.addf %5, %7 : vector<1x256xf32>
    %c0_4 = arith.constant 0 : index
    %c0_5 = arith.constant 0 : index
    %9 = vector.load %arg4[%c0_4, %c0_5] : memref<1x256xf32, #tpu.memory_space<vmem>>, vector<1x256xf32>
    tpu.vector_store %arg4[%c0_4, %c0_5], %8 {strides = array<i32>} : memref<1x256xf32, #tpu.memory_space<vmem>>, vector<1x256xf32>,
    return
  }
  func.func @transform_0(%arg0: i32) -> i32 {
    %c0_i32 = arith.constant 0 : i32
    %c0_i32_0 = arith.constant 0 : i32
    return %c0_i32 : i32
  }
  func.func @transform_1(%arg0: i32) -> (i32, i32) {
    %c0_i32 = arith.constant 0 : i32
    %c0_i32_0 = arith.constant 0 : i32
    %c0_i32_1 = arith.constant 0 : i32
    return %c0_i32, %c0_i32_0 : i32, i32
  }
  func.func @transform_2(%arg0: i32) -> (i32, i32) {
    %c0_i32 = arith.constant 0 : i32
    %c0_i32_0 = arith.constant 0 : i32
    return %c0_i32, %arg0 : i32, i32
  }
  func.func @transform_3(%arg0: i32) -> (i32, i32) {
    %c0_i32 = arith.constant 0 : i32
    %c0_i32_0 = arith.constant 0 : i32
    return %c0_i32, %arg0 : i32, i32
  }
}

</mosaic_0001>

<llo_original>
// kernel: tpu_custom_call.1
$region0: #{tpu_custom_call.1}
  #allocation0 [shape = 'u32[]', space=smem, size = 0x4, offset = 0x4, fixed_abs, tag = 'smem constant byte address 0x4 - core index']
  #allocation1 [shape = 'u32[144,128]{1,0:T(1,128)}', space=vmem, size = 0x12000, scoped, tag = 'internal scratch']
  #allocation2 [shape = 'f32[1]{0:T(128)S(6)}', space=smem, size = 0x200, scoped, tag = 'scoped memory for tpu_custom_call.1']
  %s0 = inlined_call_operand.<no memory space> [shape: f32[1], index: 0, kind: input, shape index: {}]
  %s1 = inlined_call_operand.vmem [shape: f32[5,1], index: 1, kind: input, shape index: {}]
  %s2 = inlined_call_operand.vmem [shape: f32[5,256], index: 2, kind: input, shape index: {}]
  %s3 = inlined_call_operand.hbm [shape: f32[1,256], index: 3, kind: output, shape index: {}]
  %s4 = sld [smem:[#allocation0]]
  $region22: #{tpu_custom_call.1} parent=0
    _
  %s6 = ssub.s32 1, %s4
  %s7 = scalar_select 0, %s6, %s4
  %8 = sst [smem:[#allocation2]] %s0
  $region1: #{tpu_custom_call.1} parent=0
    #allocation3 [shape = 'u8[1024]{0}', space=vmem, size = 0x400, scoped, tag = 'output window, operand 0, single buffered']
    #allocation4 [shape = 's32[1]{0}', space=sflag, size = 0x4, scoped, tag = 'scoped memory for tpu_custom_call.1']
    %9 = vsyncpa [#allocation4], 0
    // Predicated region
    $region2: #{tpu_custom_call.1} parent=1 // pred_check
      _
    $region3: #{tpu_custom_call.1} parent=1 // pred_check_branch
      %11 = sbr.rel (0) target = $region5
    $region4: #{tpu_custom_call.1} parent=1 // pred_region
      _
    $region5: #{tpu_custom_call.1} parent=1 // pred_fallthru
      _
    // Predicated region
    $region6: #{tpu_custom_call.1} parent=1 // pred_check
      _
    $region7: #{tpu_custom_call.1} parent=1 // pred_check_branch
      %13 = sbr.rel (0) target = $region9
    $region8: #{tpu_custom_call.1} parent=1 // pred_region
      _
    $region9: #{tpu_custom_call.1} parent=1 // pred_fallthru
      _
    // Predicated region
    $region10: #{tpu_custom_call.1} parent=1 // pred_check
      _
    $region11: #{tpu_custom_call.1} parent=1 // pred_check_branch
      %15 = sbr.rel (0) target = $region13
    $region12: #{tpu_custom_call.1} parent=1 // pred_region
      _
    $region13: #{tpu_custom_call.1} parent=1 // pred_fallthru
      _
    %v16 = vld [vmem:[%s2] sm:$0x1f]
    %v17 = vld [vmem:[%s2 + $0x8] sm:$0x1f]
    %v18 = vld [vmem:[%s1] sm:$0x1f]
    %20 = vset.pattern.permute.xlu0 0
    %21 = vperm.xlu0 %20, %v18
    %v22 = vpop.permute.xlu0 %21
    %v24 = vmul.f32 %v16, %v22
    %v25 = vmul.f32 %v17, %v22
    %vm26 = vcmask 1044480
    %v27 = vsel %vm26, %v24, 0.0
    %v28 = vrot.slane %v27, 4
    %v29 = vadd.f32 %v27, %v28
    %v30 = vrot.slane %v29, 2
    %v31 = vadd.f32 %v29, %v30
    %v32 = vrot.slane %v31, 1
    %v33 = vadd.f32 %v31, %v32
    %v34 = vsel %vm26, %v25, 0.0
    %v35 = vrot.slane %v34, 4
    %v36 = vadd.f32 %v34, %v35
    %v37 = vrot.slane %v36, 2
    %v38 = vadd.f32 %v36, %v37
    %v39 = vrot.slane %v38, 1
    %v40 = vadd.f32 %v38, %v39
    %s41 = sld [smem:[#allocation2]]
    %v42 = vstv %s41
    %v43 = vadd.f32 %v33, %v42
    %v44 = vadd.f32 %v40, %v42
    %v47 = vcombine.low %v43, %v44
    %v49 = vunpack.c.l.s4 1966171168
    %v50 = vunpack.c.0.s8 %v49
    %v51 = vlaneseq
    %v52 = vshrl.u32 %v51, 7
    %v53 = vsub.s32 %v50, %v52
    %v54 = vrot.slane %v47, %v53
    %v56 = vunpack.c.l.s4 1966171168
    %v57 = vunpack.c.0.s8 %v56
    %v58 = vlaneseq
    %v59 = vshrl.u32 %v58, 7
    %v60 = vsub.s32 %v57, %v59
    %v61 = vrot.slane %v54, %v60
    %v63 = vlaneseq
    %vm64 = vcmp.ge.s32.totalorder %v63, 0
    %vm65 = vcmp.lt.s32.totalorder %v63, 256
    %vm66 = vmand %vm64, %vm65
    %67 = vst.msk [vmem:[#allocation3] sm:$0x3] %vm66, %v61
    // Predicated region
    $region14: #{tpu_custom_call.1} parent=1 // pred_check
      _
    $region15: #{tpu_custom_call.1} parent=1 // pred_check_branch
      %69 = sbr.rel (0) target = $region17
    $region16: #{tpu_custom_call.1} parent=1 // pred_region
      %s71 = ssub.s32 32, 32
      %72 = vsyncadd [#allocation4], %s71
      %s74 = sshll.u32 [#allocation3], 4
      %s75 = int_to_ptr.vmem [resolvable:$true] %s74
      %77 = dma.vmem_to_hbm [thread:$0]  %s75, 32, %s3, [#allocation4]
    $region17: #{tpu_custom_call.1} parent=1 // pred_fallthru
      _
    // Predicated region
    $region18: #{tpu_custom_call.1} parent=1 // pred_check
      _
    $region19: #{tpu_custom_call.1} parent=1 // pred_check_branch
      %79 = sbr.rel (0) target = $region21
    $region20: #{tpu_custom_call.1} parent=1 // pred_region
      %80 = dma.done [#allocation4], 32
    $region21: #{tpu_custom_call.1} parent=1 // pred_fallthru
      _
    %81 = vsyncpa [#allocation4], 1

</llo_original>
